<compile_context>
chip_gen: v7x
topology: tpu7x:2x2x1
jax: 0.10.0
libtpu: 0.0.40
codegen_flags: <defaults>
</compile_context>

<pallas_src>
import jax
import jax.numpy as jnp
from jax.experimental import pallas as pl
from jax.experimental.pallas import tpu as pltpu

IN_DIM = 12
HID1, HID2 = 500, 100
HID1_P, HID2_P = 512, 128      # lane-padded hidden sizes
MAX_TILE_B = 1024              # comfortably inside scoped VMEM on v5e/v6e/v7x


def _mlp_kernel(x_ref, w1_ref, b1_ref, w2_ref, b2_ref, w3_ref, b3_ref, o_ref):
    # Cast the input tile to bf16 on-chip (VPU); MXU wants bf16 operands.
    xb = x_ref[...].astype(jnp.bfloat16)

    # Layer 1: [TB,12]bf16 @ [12,512]bf16 -> f32 ; bias + relu in f32.
    h1 = jnp.dot(xb, w1_ref[...], preferred_element_type=jnp.float32)
    h1 = jnp.maximum(h1 + b1_ref[...], 0.0)
    # dropout1: identity (eval mode)

    # Layer 2: [TB,512]bf16 @ [512,128]bf16 -> f32 ; bias + relu in f32.
    h2 = jnp.dot(h1.astype(jnp.bfloat16), w2_ref[...],
                 preferred_element_type=jnp.float32)
    h2 = jnp.maximum(h2 + b2_ref[...], 0.0)
    # dropout2: identity (eval mode)

    # Layer 3 (N=1): VPU multiply + lane reduce instead of a 1-column matmul.
    # w3_ref is the [1,128] row form of W3; b3_ref is a scalar in SMEM.
    y = jnp.sum(h2 * w3_ref[...], axis=-1, keepdims=True) + b3_ref[0]
    o_ref[...] = jnp.maximum(y, 0.0).astype(o_ref.dtype)


def ann_model_forward(x, packed_params):
    """Fused MLP forward. x: [B, 12] float32 -> [B, 1] float32."""
    w1, b1, w2, b2, w3, b3 = packed_params
    B = x.shape[0]

    # Tile the batch: multiple of 8, capped so per-step VMEM stays small.
    tile_b = min(MAX_TILE_B, pl.cdiv(B, 8) * 8)
    b_pad = pl.cdiv(B, tile_b) * tile_b
    if b_pad != B:
        x = jnp.pad(x, ((0, b_pad - B), (0, 0)))

    grid = (b_pad // tile_b,)

    out = pl.pallas_call(
        _mlp_kernel,
        out_shape=jax.ShapeDtypeStruct((b_pad, 1), jnp.float32),
        grid=grid,
        in_specs=[
            pl.BlockSpec((tile_b, IN_DIM), lambda i: (i, 0)),     # x tile (f32)
            pl.BlockSpec((IN_DIM, HID1_P), lambda i: (0, 0)),     # W1 (resident)
            pl.BlockSpec((1, HID1_P), lambda i: (0, 0)),          # b1
            pl.BlockSpec((HID1_P, HID2_P), lambda i: (0, 0)),     # W2 (resident)
            pl.BlockSpec((1, HID2_P), lambda i: (0, 0)),          # b2
            pl.BlockSpec((1, HID2_P), lambda i: (0, 0)),          # W3 as a row
            pl.BlockSpec(memory_space=pltpu.MemorySpace.SMEM),    # b3 scalar
        ],
        out_specs=pl.BlockSpec((tile_b, 1), lambda i: (i, 0)),
        compiler_params=pltpu.CompilerParams(
            dimension_semantics=("parallel",),
        ),
    )(x, w1, b1, w2, b2, w3, b3)

    return out[:B]


def init_params(key):
    """PyTorch nn.Linear default init: U(-1/sqrt(fan_in), 1/sqrt(fan_in)).
    Weights stored as [in, out] (transpose of PyTorch's [out, in])."""
    dims = [(IN_DIM, HID1), (HID1, HID2), (HID2, 1)]
    params = []
    for fan_in, fan_out in dims:
        key, kw, kb = jax.random.split(key, 3)
        bound = 1.0 / float(fan_in) ** 0.5
        w = jax.random.uniform(kw, (fan_in, fan_out), jnp.float32,
                               minval=-bound, maxval=bound)
        b = jax.random.uniform(kb, (1, fan_out), jnp.float32,
                               minval=-bound, maxval=bound)
        params.extend([w, b])
    return tuple(params)


def pack_params(raw_params):
    """Pad hidden dims to lane-friendly sizes and cast matmul weights to bf16."""
    w1, b1, w2, b2, w3, b3 = raw_params
    w1p = jnp.pad(w1, ((0, 0), (0, HID1_P - HID1))).astype(jnp.bfloat16)
    b1p = jnp.pad(b1, ((0, 0), (0, HID1_P - HID1)))                     # f32
    w2p = jnp.pad(w2, ((0, HID1_P - HID1), (0, HID2_P - HID2))).astype(jnp.bfloat16)
    b2p = jnp.pad(b2, ((0, 0), (0, HID2_P - HID2)))                     # f32
    w3p = jnp.pad(w3, ((0, HID2_P - HID2), (0, 0))).T                   # [1,128] f32
    b3p = b3.reshape((1,))                                              # SMEM scalar
    return (w1p, b1p, w2p, b2p, w3p, b3p)


def reference_forward_emulated(x, packed_params):
    """Pure-JAX reference with the same bf16/f32 numerics as the kernel."""
    w1, b1, w2, b2, w3, b3 = packed_params
    xb = x.astype(jnp.bfloat16)
    h1 = jnp.maximum(jnp.dot(xb, w1, preferred_element_type=jnp.float32) + b1, 0.0)
    h2 = jnp.maximum(
        jnp.dot(h1.astype(jnp.bfloat16), w2, preferred_element_type=jnp.float32) + b2,
        0.0)
    y = jnp.sum(h2 * w3, axis=-1, keepdims=True) + b3[0]
    return jnp.maximum(y, 0.0)


def reference_forward_f32(x, raw_params):
    """Pure f32 PyTorch-semantics reference (loose check)."""
    w1, b1, w2, b2, w3, b3 = raw_params
    h1 = jnp.maximum(x @ w1 + b1, 0.0)
    h2 = jnp.maximum(h1 @ w2 + b2, 0.0)
    return jnp.maximum(h2 @ w3 + b3, 0.0)


if __name__ == "__main__":
    key = jax.random.PRNGKey(0)
    key, kx = jax.random.split(key)

    B = 8  # small batch
    x = jax.random.normal(kx, (B, IN_DIM), jnp.float32)

    raw_params = init_params(key)
    packed = pack_params(raw_params)

    out = ann_model_forward(x, packed)
    out = jax.block_until_ready(out)
    assert out.shape == (B, 1)

    # Tight check vs a reference with identical bf16/f32 numerics.
    ref_emu = reference_forward_emulated(x, packed)
    assert jnp.allclose(out, ref_emu, atol=1e-3, rtol=1e-3), \
        "mismatch vs bf16-emulated reference"

    # Loose check vs pure-f32 PyTorch-semantics reference (bf16 weight error).
    ref_f32 = reference_forward_f32(x, raw_params)
    assert jnp.allclose(out, ref_f32, atol=5e-2, rtol=5e-2), \
        "mismatch vs f32 reference"

    print("KERNEL_OK")
</pallas_src>

<mosaic_0001>
module attributes {stable_mosaic.version = 11 : i64} {
  func.func @_mlp_kernel(%arg0: i32, %arg1: memref<8x12xf32, #tpu.memory_space<vmem>>, %arg2: memref<12x512xbf16, #tpu.memory_space<vmem>>, %arg3: memref<1x512xf32, #tpu.memory_space<vmem>>, %arg4: memref<512x128xbf16, #tpu.memory_space<vmem>>, %arg5: memref<1x128xf32, #tpu.memory_space<vmem>>, %arg6: memref<1x128xf32, #tpu.memory_space<vmem>>, %arg7: memref<1xf32, #tpu.memory_space<smem>>, %arg8: memref<8x1xf32, #tpu.memory_space<vmem>>) attributes {dimension_semantics = [#tpu.dimension_semantics<parallel>], iteration_bounds = array<i64: 1>, scalar_prefetch = 0 : i64, scratch_operands = 0 : i64, tpu.core_type = #tpu.core_type<tc>, window_params = [{transform_indices = @transform_0, window_bounds = array<i64: 8, 12>}, {pipeline_mode = #tpu.pipeline_mode<synchronous>, transform_indices = @transform_1, window_bounds = array<i64: 12, 512>}, {pipeline_mode = #tpu.pipeline_mode<synchronous>, transform_indices = @transform_2, window_bounds = array<i64: 1, 512>}, {pipeline_mode = #tpu.pipeline_mode<synchronous>, transform_indices = @transform_3, window_bounds = array<i64: 512, 128>}, {pipeline_mode = #tpu.pipeline_mode<synchronous>, transform_indices = @transform_4, window_bounds = array<i64: 1, 128>}, {pipeline_mode = #tpu.pipeline_mode<synchronous>, transform_indices = @transform_5, window_bounds = array<i64: 1, 128>}, {transform_indices = @transform_6, window_bounds = array<i64: 1>}, {transform_indices = @transform_7, window_bounds = array<i64: 8, 1>}]} {
    %c0 = arith.constant 0 : index
    %c0_0 = arith.constant 0 : index
    %0 = vector.load %arg1[%c0, %c0_0] : memref<8x12xf32, #tpu.memory_space<vmem>>, vector<8x12xf32>
    %1 = arith.truncf %0 : vector<8x12xf32> to vector<8x12xbf16>
    %c0_1 = arith.constant 0 : index
    %c0_2 = arith.constant 0 : index
    %2 = vector.load %arg2[%c0_1, %c0_2] : memref<12x512xbf16, #tpu.memory_space<vmem>>, vector<12x512xbf16>
    %cst = arith.constant dense<0.000000e+00> : vector<8x512xf32>
    %3 = tpu.matmul %1, %2, %cst {dimension_numbers = #tpu.dot_dimension_numbers<[1], [0], [0], [1], [0, 0, 1, 1], [], []>} : vector<8x12xbf16>, vector<12x512xbf16>, vector<8x512xf32> -> vector<8x512xf32>
    %c0_3 = arith.constant 0 : index
    %c0_4 = arith.constant 0 : index
    %4 = vector.load %arg3[%c0_3, %c0_4] : memref<1x512xf32, #tpu.memory_space<vmem>>, vector<1x512xf32>
    %5 = vector.broadcast %4 : vector<1x512xf32> to vector<8x512xf32>
    %6 = arith.addf %3, %5 : vector<8x512xf32>
    %cst_5 = arith.constant 0.000000e+00 : f32
    %7 = vector.broadcast %cst_5 : f32 to vector<8x512xf32>
    %8 = arith.maximumf %6, %7 : vector<8x512xf32>
    %9 = arith.truncf %8 : vector<8x512xf32> to vector<8x512xbf16>
    %c0_6 = arith.constant 0 : index
    %c0_7 = arith.constant 0 : index
    %10 = vector.load %arg4[%c0_6, %c0_7] : memref<512x128xbf16, #tpu.memory_space<vmem>>, vector<512x128xbf16>
    %cst_8 = arith.constant dense<0.000000e+00> : vector<8x128xf32>
    %11 = tpu.matmul %9, %10, %cst_8 {dimension_numbers = #tpu.dot_dimension_numbers<[1], [0], [0], [1], [0, 0, 1, 1], [], []>} : vector<8x512xbf16>, vector<512x128xbf16>, vector<8x128xf32> -> vector<8x128xf32>
    %c0_9 = arith.constant 0 : index
    %c0_10 = arith.constant 0 : index
    %12 = vector.load %arg5[%c0_9, %c0_10] : memref<1x128xf32, #tpu.memory_space<vmem>>, vector<1x128xf32>
    %13 = vector.broadcast %12 : vector<1x128xf32> to vector<8x128xf32>
    %14 = arith.addf %11, %13 : vector<8x128xf32>
    %cst_11 = arith.constant 0.000000e+00 : f32
    %15 = vector.broadcast %cst_11 : f32 to vector<8x128xf32>
    %16 = arith.maximumf %14, %15 : vector<8x128xf32>
    %c0_12 = arith.constant 0 : index
    %c0_13 = arith.constant 0 : index
    %17 = vector.load %arg6[%c0_12, %c0_13] : memref<1x128xf32, #tpu.memory_space<vmem>>, vector<1x128xf32>
    %18 = vector.broadcast %17 : vector<1x128xf32> to vector<8x128xf32>
    %19 = arith.mulf %16, %18 : vector<8x128xf32>
    %cst_14 = arith.constant dense<0.000000e+00> : vector<8xf32>
    %20 = vector.multi_reduction <add>, %19, %cst_14 [1] : vector<8x128xf32> to vector<8xf32>
    %21 = vector.shape_cast %20 : vector<8xf32> to vector<8x1xf32>
    %c0_15 = arith.constant 0 : index
    %22 = memref.load %arg7[%c0_15] : memref<1xf32, #tpu.memory_space<smem>>
    %23 = vector.broadcast %22 : f32 to vector<8x1xf32>
    %24 = arith.addf %21, %23 : vector<8x1xf32>
    %cst_16 = arith.constant 0.000000e+00 : f32
    %25 = vector.broadcast %cst_16 : f32 to vector<8x1xf32>
    %26 = arith.maximumf %24, %25 : vector<8x1xf32>
    %c0_17 = arith.constant 0 : index
    %c0_18 = arith.constant 0 : index
    %27 = vector.load %arg8[%c0_17, %c0_18] : memref<8x1xf32, #tpu.memory_space<vmem>>, vector<8x1xf32>
    tpu.vector_store %arg8[%c0_17, %c0_18], %26 {strides = array<i32>} : memref<8x1xf32, #tpu.memory_space<vmem>>, vector<8x1xf32>,
    return
  }
  func.func @transform_0(%arg0: i32) -> (i32, i32) {
    %c0_i32 = arith.constant 0 : i32
    %c0_i32_0 = arith.constant 0 : i32
    return %arg0, %c0_i32 : i32, i32
  }
  func.func @transform_1(%arg0: i32) -> (i32, i32) {
    %c0_i32 = arith.constant 0 : i32
    %c0_i32_0 = arith.constant 0 : i32
    %c0_i32_1 = arith.constant 0 : i32
    return %c0_i32, %c0_i32_0 : i32, i32
  }
  func.func @transform_2(%arg0: i32) -> (i32, i32) {
    %c0_i32 = arith.constant 0 : i32
    %c0_i32_0 = arith.constant 0 : i32
    %c0_i32_1 = arith.constant 0 : i32
    return %c0_i32, %c0_i32_0 : i32, i32
  }
  func.func @transform_3(%arg0: i32) -> (i32, i32) {
    %c0_i32 = arith.constant 0 : i32
    %c0_i32_0 = arith.constant 0 : i32
    %c0_i32_1 = arith.constant 0 : i32
    return %c0_i32, %c0_i32_0 : i32, i32
  }
  func.func @transform_4(%arg0: i32) -> (i32, i32) {
    %c0_i32 = arith.constant 0 : i32
    %c0_i32_0 = arith.constant 0 : i32
    %c0_i32_1 = arith.constant 0 : i32
    return %c0_i32, %c0_i32_0 : i32, i32
  }
  func.func @transform_5(%arg0: i32) -> (i32, i32) {
    %c0_i32 = arith.constant 0 : i32
    %c0_i32_0 = arith.constant 0 : i32
    %c0_i32_1 = arith.constant 0 : i32
    return %c0_i32, %c0_i32_0 : i32, i32
  }
  func.func @transform_6(%arg0: i32) -> i32 {
    %c0_i32 = arith.constant 0 : i32
    %c0_i32_0 = arith.constant 0 : i32
    return %c0_i32 : i32
  }
  func.func @transform_7(%arg0: i32) -> (i32, i32) {
    %c0_i32 = arith.constant 0 : i32
    %c0_i32_0 = arith.constant 0 : i32
    return %arg0, %c0_i32 : i32, i32
  }
}

</mosaic_0001>

<llo_original>
// kernel: tpu_custom_call.1
$region0: #{tpu_custom_call.1}
  #allocation0 [shape = 'u32[]', space=smem, size = 0x4, offset = 0x4, fixed_abs, tag = 'smem constant byte address 0x4 - core index']
  #allocation1 [shape = 'u32[144,128]{1,0:T(1,128)}', space=vmem, size = 0x12000, scoped, tag = 'internal scratch']
  #allocation2 [shape = 'f32[1]{0:T(128)S(6)}', space=smem, size = 0x200, scoped, tag = 'scoped memory for tpu_custom_call.1']
  %s0 = inlined_call_operand.hbm [shape: f32[8,12], index: 0, kind: input, shape index: {}]
  %s1 = inlined_call_operand.hbm [shape: bf16[12,512], index: 1, kind: input, shape index: {}]
  %s2 = inlined_call_operand.vmem [shape: f32[1,512], index: 2, kind: input, shape index: {}]
  %s3 = inlined_call_operand.hbm [shape: bf16[512,128], index: 3, kind: input, shape index: {}]
  %s4 = inlined_call_operand.vmem [shape: f32[1,128], index: 4, kind: input, shape index: {}]
  %s5 = inlined_call_operand.vmem [shape: f32[1,128], index: 5, kind: input, shape index: {}]
  %s6 = inlined_call_operand.<no memory space> [shape: f32[1], index: 6, kind: input, shape index: {}]
  %s7 = inlined_call_operand.vmem [shape: f32[8,1], index: 7, kind: output, shape index: {}]
  %s8 = sld [smem:[#allocation0]]
  $region50: #{tpu_custom_call.1} parent=0
    _
  %s10 = ssub.s32 1, %s8
  %s11 = scalar_select 0, %s10, %s8
  %12 = sst [smem:[#allocation2]] %s6
  $region1: #{tpu_custom_call.1} parent=0
    #allocation3 [shape = 'u8[4096]{0}', space=vmem, size = 0x1000, scoped, tag = 'input window, operand 0, single buffered']
    #allocation4 [shape = 's32[1]{0}', space=sflag, size = 0x4, scoped, tag = 'scoped memory for tpu_custom_call.1']
    #allocation5 [shape = 'u8[16384]{0}', space=vmem, size = 0x4000, scoped, tag = 'input window, operand 1, single buffered']
    #allocation6 [shape = 's32[1]{0}', space=sflag, size = 0x4, scoped, tag = 'scoped memory for tpu_custom_call.1']
    #allocation7 [shape = 'u8[131072]{0}', space=vmem, size = 0x20000, scoped, tag = 'input window, operand 3, single buffered']
    %13 = vsyncpa [#allocation4], 0
    %14 = vsyncpa [#allocation6], 0
    // Predicated region
    $region2: #{tpu_custom_call.1} parent=1 // pred_check
      _
    $region3: #{tpu_custom_call.1} parent=1 // pred_check_branch
      %16 = sbr.rel (0) target = $region5
    $region4: #{tpu_custom_call.1} parent=1 // pred_region
      %s18 = ssub.s32 128, 128
      %19 = vsyncadd [#allocation4], %s18
      %s21 = sshll.u32 [#allocation3], 4
      %s22 = int_to_ptr.vmem [resolvable:$true] %s21
      %24 = dma.hbm_to_vmem [thread:$0]  %s0, 128, %s22, [#allocation4]
    $region5: #{tpu_custom_call.1} parent=1 // pred_fallthru
      _
    // Predicated region
    $region6: #{tpu_custom_call.1} parent=1 // pred_check
      _
    $region7: #{tpu_custom_call.1} parent=1 // pred_check_branch
      %26 = sbr.rel (0) target = $region9
    $region8: #{tpu_custom_call.1} parent=1 // pred_region
      %s28 = ssub.s32 512, 512
      %29 = vsyncadd [#allocation6], %s28
      %s30 = sshll.u32 [#allocation5], 4
      %s31 = int_to_ptr.vmem [resolvable:$true] %s30
      %36 = dma.hbm_to_vmem [thread:$0]  %s1, 512, %s31, [#allocation6], 256, 256, 16
    $region9: #{tpu_custom_call.1} parent=1 // pred_fallthru
      _
    // Predicated region
    $region10: #{tpu_custom_call.1} parent=1 // pred_check
      _
    $region11: #{tpu_custom_call.1} parent=1 // pred_check_branch
      %38 = sbr.rel (0) target = $region13
    $region12: #{tpu_custom_call.1} parent=1 // pred_region
      _
    $region13: #{tpu_custom_call.1} parent=1 // pred_fallthru
      _
    // Predicated region
    $region14: #{tpu_custom_call.1} parent=1 // pred_check
      _
    $region15: #{tpu_custom_call.1} parent=1 // pred_check_branch
      %40 = sbr.rel (0) target = $region17
    $region16: #{tpu_custom_call.1} parent=1 // pred_region
      %s42 = ssub.s32 4096, 4096
      %43 = vsyncadd [#allocation6], %s42
      %s44 = sshll.u32 [#allocation7], 4
      %s45 = int_to_ptr.vmem [resolvable:$true] %s44
      %50 = dma.hbm_to_vmem [thread:$0]  %s3, 4096, %s45, [#allocation6], 64, 64, 4
    $region17: #{tpu_custom_call.1} parent=1 // pred_fallthru
      _
    // Predicated region
    $region18: #{tpu_custom_call.1} parent=1 // pred_check
      _
    $region19: #{tpu_custom_call.1} parent=1 // pred_check_branch
      %52 = sbr.rel (0) target = $region21
    $region20: #{tpu_custom_call.1} parent=1 // pred_region
      _
    $region21: #{tpu_custom_call.1} parent=1 // pred_fallthru
      _
    // Predicated region
    $region22: #{tpu_custom_call.1} parent=1 // pred_check
      _
    $region23: #{tpu_custom_call.1} parent=1 // pred_check_branch
      %54 = sbr.rel (0) target = $region25
    $region24: #{tpu_custom_call.1} parent=1 // pred_region
      _
    $region25: #{tpu_custom_call.1} parent=1 // pred_fallthru
      _
    // Predicated region
    $region26: #{tpu_custom_call.1} parent=1 // pred_check
      _
    $region27: #{tpu_custom_call.1} parent=1 // pred_check_branch
      %56 = sbr.rel (0) target = $region29
    $region28: #{tpu_custom_call.1} parent=1 // pred_region
      _
    $region29: #{tpu_custom_call.1} parent=1 // pred_fallthru
      _
    // Predicated region
    $region30: #{tpu_custom_call.1} parent=1 // pred_check
      _
    $region31: #{tpu_custom_call.1} parent=1 // pred_check_branch
      %58 = sbr.rel (0) target = $region33
    $region32: #{tpu_custom_call.1} parent=1 // pred_region
      %59 = dma.done [#allocation4], 128
    $region33: #{tpu_custom_call.1} parent=1 // pred_fallthru
      _
    // Predicated region
    $region34: #{tpu_custom_call.1} parent=1 // pred_check
      _
    $region35: #{tpu_custom_call.1} parent=1 // pred_check_branch
      %61 = sbr.rel (0) target = $region37
    $region36: #{tpu_custom_call.1} parent=1 // pred_region
      %62 = dma.done [#allocation6], 512
    $region37: #{tpu_custom_call.1} parent=1 // pred_fallthru
      _
    // Predicated region
    $region38: #{tpu_custom_call.1} parent=1 // pred_check
      _
    $region39: #{tpu_custom_call.1} parent=1 // pred_check_branch
      %64 = sbr.rel (0) target = $region41
    $region40: #{tpu_custom_call.1} parent=1 // pred_region
      %65 = dma.done [#allocation6], 4096
    $region41: #{tpu_custom_call.1} parent=1 // pred_fallthru
      _
    %v67 = vld [vmem:[#allocation3] sm:$0xff]
    %v68 = vpack.c.bf16 %v67, %v67
    %v69 = vld [vmem:[#allocation5] sm:$0xff]
    %v70 = vld [vmem:[#allocation5 + $0x8] sm:$0xff]
    %v71 = vld [vmem:[#allocation5 + $0x10] sm:$0x33]
    %v72 = vld [vmem:[#allocation5 + $0x18] sm:$0x33]
    %v73 = vld [vmem:[%s2] sm:$0xf]
    %v75 = vlaneseq
    %v76 = vshrl.u32 %v75, 7
    %v77 = vsub.s32 0, %v76
    %v78 = vrot.slane %v73, %v77
    %v79 = vlaneseq
    %v80 = vshrl.u32 %v79, 7
    %v81 = vsub.s32 1, %v80
    %v82 = vrot.slane %v73, %v81
    %v83 = vlaneseq
    %v84 = vshrl.u32 %v83, 7
    %v85 = vsub.s32 2, %v84
    %v86 = vrot.slane %v73, %v85
    %v87 = vlaneseq
    %v88 = vshrl.u32 %v87, 7
    %v89 = vsub.s32 3, %v88
    %v90 = vrot.slane %v73, %v89
    %v99 = vunpack.c.l.b16 %v69
    %v100 = vunpack.c.h.b16 %v69
    %v101 = vunpack.c.l.b16 %v70
    %v102 = vunpack.c.h.b16 %v70
    %v103 = vunpack.c.l.b16 %v71
    %v104 = vunpack.c.h.b16 %v71
    %v105 = vunpack.c.l.b16 %v72
    %v106 = vunpack.c.h.b16 %v72
    %v107 = vpack.c.b16 %v103, %v99
    %v108 = vpack.c.b16 %v104, %v100
    %v109 = vpack.c.b16 %v105, %v101
    %v110 = vpack.c.b16 %v106, %v102
    %vm111 = vcmask 97280
    %v113 = vsel %vm111, %v68, 0
    %vm115 = vcmask 1045504
    %v117 = vsel %vm115, %v107, 0
    %v120 = vsel %vm115, %v108, 0
    %v123 = vsel %vm115, %v109, 0
    %v126 = vsel %vm115, %v110, 0
    %128 = vmatprep.subr.bf16.mxu0 %v120
    %129 = vmatpush1.bf16.msra.mxu0 %v117
    %130 = vmatprep.subr.bf16.mxu0 0
    %131 = vmatpush1.bf16.msra.mxu0 0
    %132 = vmatprep.subr.bf16.mxu0 0
    %133 = vmatpush1.bf16.msra.mxu0 0
    %134 = vmatprep.subr.bf16.mxu0 0
    %135 = vmatpush1.bf16.msra.mxu0 0
    %136 = vmatprep.subr.bf16.mxu0 0
    %137 = vmatpush1.bf16.msra.mxu0 0
    %138 = vmatprep.subr.bf16.mxu0 0
    %139 = vmatpush1.bf16.msra.mxu0 0
    %140 = vmatprep.subr.bf16.mxu0 0
    %141 = vmatpush1.bf16.msra.mxu0 0
    %142 = vmatprep.subr.bf16.mxu0 0
    %143 = vmatpush1.bf16.msra.mxu0 0
    %144 = vmatprep.subr.bf16.mxu0 0
    %145 = vmatpush1.bf16.msra.mxu0 0
    %146 = vmatprep.subr.bf16.mxu0 0
    %147 = vmatpush1.bf16.msra.mxu0 0
    %148 = vmatprep.subr.bf16.mxu0 0
    %149 = vmatpush1.bf16.msra.mxu0 0
    %150 = vmatprep.subr.bf16.mxu0 0
    %151 = vmatpush1.bf16.msra.mxu0 0
    %152 = vmatprep.subr.bf16.mxu0 0
    %153 = vmatpush1.bf16.msra.mxu0 0
    %154 = vmatprep.subr.bf16.mxu0 0
    %155 = vmatpush1.bf16.msra.mxu0 0
    %156 = vmatprep.subr.bf16.mxu0 0
    %157 = vmatpush1.bf16.msra.mxu0 0
    %158 = vmatprep.subr.bf16.mxu0 0
    %159 = vmatpush1.bf16.msra.mxu0 0
    %160 = vmatprep.mubr.bf16.mxu0 0
    %161 = vmatmul.mubr.bf16.gmra.mrb[0].mxu0 %v113
    %v162 = vpop.f32.mrb[0].mxu0
    %v163 = vadd.f32 %v78, %v162
    %v164 = vpop.f32.mrb[0].mxu0
    %v165 = vadd.f32 %v82, %v164
    %v166 = vpop.f32.mrb[0].mxu0
    %v167 = vpop.f32.mrb[0].mxu0
    %168 = vdwg.mxu0
    %169 = vmatprep.subr.bf16.mxu0 %v126
    %170 = vmatpush1.bf16.msra.mxu0 %v123
    %171 = vmatprep.subr.bf16.mxu0 0
    %172 = vmatpush1.bf16.msra.mxu0 0
    %173 = vmatprep.subr.bf16.mxu0 0
    %174 = vmatpush1.bf16.msra.mxu0 0
    %175 = vmatprep.subr.bf16.mxu0 0
    %176 = vmatpush1.bf16.msra.mxu0 0
    %177 = vmatprep.subr.bf16.mxu0 0
    %178 = vmatpush1.bf16.msra.mxu0 0
    %179 = vmatprep.subr.bf16.mxu0 0
    %180 = vmatpush1.bf16.msra.mxu0 0
    %181 = vmatprep.subr.bf16.mxu0 0
    %182 = vmatpush1.bf16.msra.mxu0 0
    %183 = vmatprep.subr.bf16.mxu0 0
    %184 = vmatpush1.bf16.msra.mxu0 0
    %185 = vmatprep.subr.bf16.mxu0 0
    %186 = vmatpush1.bf16.msra.mxu0 0
    %187 = vmatprep.subr.bf16.mxu0 0
    %188 = vmatpush1.bf16.msra.mxu0 0
    %189 = vmatprep.subr.bf16.mxu0 0
    %190 = vmatpush1.bf16.msra.mxu0 0
    %191 = vmatprep.subr.bf16.mxu0 0
    %192 = vmatpush1.bf16.msra.mxu0 0
    %193 = vmatprep.subr.bf16.mxu0 0
    %194 = vmatpush1.bf16.msra.mxu0 0
    %195 = vmatprep.subr.bf16.mxu0 0
    %196 = vmatpush1.bf16.msra.mxu0 0
    %197 = vmatprep.subr.bf16.mxu0 0
    %198 = vmatpush1.bf16.msra.mxu0 0
    %199 = vmatprep.subr.bf16.mxu0 0
    %200 = vmatpush1.bf16.msra.mxu0 0
    %201 = vmatprep.mubr.bf16.mxu0 0
    %202 = vmatmul.mubr.bf16.gmra.mrb[0].mxu0 %v113
    %v203 = vpop.f32.mrb[0].mxu0
    %v204 = vadd.f32 %v86, %v203
    %v205 = vpop.f32.mrb[0].mxu0
    %v206 = vadd.f32 %v90, %v205
    %v207 = vpop.f32.mrb[0].mxu0
    %v208 = vpop.f32.mrb[0].mxu0
    %209 = vdwg.mxu0
    %v210 = vmax.f32 %v163, 0.0
    %v211 = vmax.f32 %v165, 0.0
    %v212 = vmax.f32 %v204, 0.0
    %v213 = vmax.f32 %v206, 0.0
    %v214 = vpack.c.bf16 %v210, %v210
    %v215 = vpack.c.bf16 %v211, %v211
    %v216 = vpack.c.bf16 %v212, %v212
    %v217 = vpack.c.bf16 %v213, %v213
    %v218 = vld [vmem:[#allocation7] sm:$0xf]
    %v219 = vld [vmem:[#allocation7 + $0x4] sm:$0xf]
    %v220 = vld [vmem:[#allocation7 + $0x8] sm:$0xf]
    %v221 = vld [vmem:[#allocation7 + $0xc] sm:$0xf]
    %v222 = vld [vmem:[#allocation7 + $0x10] sm:$0xf]
    %v223 = vld [vmem:[#allocation7 + $0x14] sm:$0xf]
    %v224 = vld [vmem:[#allocation7 + $0x18] sm:$0xf]
    %v225 = vld [vmem:[#allocation7 + $0x1c] sm:$0xf]
    %v226 = vld [vmem:[#allocation7 + $0x20] sm:$0xf]
    %v227 = vld [vmem:[#allocation7 + $0x24] sm:$0xf]
    %v228 = vld [vmem:[#allocation7 + $0x28] sm:$0xf]
    %v229 = vld [vmem:[#allocation7 + $0x2c] sm:$0xf]
    %v230 = vld [vmem:[#allocation7 + $0x30] sm:$0xf]
    %v231 = vld [vmem:[#allocation7 + $0x34] sm:$0xf]
    %v232 = vld [vmem:[#allocation7 + $0x38] sm:$0xf]
    %v233 = vld [vmem:[#allocation7 + $0x3c] sm:$0xf]
    %v234 = vld [vmem:[#allocation7 + $0x40] sm:$0xf]
    %v235 = vld [vmem:[#allocation7 + $0x44] sm:$0xf]
    %v236 = vld [vmem:[#allocation7 + $0x48] sm:$0xf]
    %v237 = vld [vmem:[#allocation7 + $0x4c] sm:$0xf]
    %v238 = vld [vmem:[#allocation7 + $0x50] sm:$0xf]
    %v239 = vld [vmem:[#allocation7 + $0x54] sm:$0xf]
    %v240 = vld [vmem:[#allocation7 + $0x58] sm:$0xf]
    %v241 = vld [vmem:[#allocation7 + $0x5c] sm:$0xf]
    %v242 = vld [vmem:[#allocation7 + $0x60] sm:$0xf]
    %v243 = vld [vmem:[#allocation7 + $0x64] sm:$0xf]
    %v244 = vld [vmem:[#allocation7 + $0x68] sm:$0xf]
    %v245 = vld [vmem:[#allocation7 + $0x6c] sm:$0xf]
    %v246 = vld [vmem:[#allocation7 + $0x70] sm:$0xf]
    %v247 = vld [vmem:[#allocation7 + $0x74] sm:$0xf]
    %v248 = vld [vmem:[#allocation7 + $0x78] sm:$0xf]
    %v249 = vld [vmem:[#allocation7 + $0x7c] sm:$0xf]
    %v250 = vld [vmem:[#allocation7 + $0x80] sm:$0xf]
    %v251 = vld [vmem:[#allocation7 + $0x84] sm:$0xf]
    %v252 = vld [vmem:[#allocation7 + $0x88] sm:$0xf]
    %v253 = vld [vmem:[#allocation7 + $0x8c] sm:$0xf]
    %v254 = vld [vmem:[#allocation7 + $0x90] sm:$0xf]
    %v255 = vld [vmem:[#allocation7 + $0x94] sm:$0xf]
    %v256 = vld [vmem:[#allocation7 + $0x98] sm:$0xf]
    %v257 = vld [vmem:[#allocation7 + $0x9c] sm:$0xf]
    %v258 = vld [vmem:[#allocation7 + $0xa0] sm:$0xf]
    %v259 = vld [vmem:[#allocation7 + $0xa4] sm:$0xf]
    %v260 = vld [vmem:[#allocation7 + $0xa8] sm:$0xf]
    %v261 = vld [vmem:[#allocation7 + $0xac] sm:$0xf]
    %v262 = vld [vmem:[#allocation7 + $0xb0] sm:$0xf]
    %v263 = vld [vmem:[#allocation7 + $0xb4] sm:$0xf]
    %v264 = vld [vmem:[#allocation7 + $0xb8] sm:$0xf]
    %v265 = vld [vmem:[#allocation7 + $0xbc] sm:$0xf]
    %v266 = vld [vmem:[#allocation7 + $0xc0] sm:$0xf]
    %v267 = vld [vmem:[#allocation7 + $0xc4] sm:$0xf]
    %v268 = vld [vmem:[#allocation7 + $0xc8] sm:$0xf]
    %v269 = vld [vmem:[#allocation7 + $0xcc] sm:$0xf]
    %v270 = vld [vmem:[#allocation7 + $0xd0] sm:$0xf]
    %v271 = vld [vmem:[#allocation7 + $0xd4] sm:$0xf]
    %v272 = vld [vmem:[#allocation7 + $0xd8] sm:$0xf]
    %v273 = vld [vmem:[#allocation7 + $0xdc] sm:$0xf]
    %v274 = vld [vmem:[#allocation7 + $0xe0] sm:$0xf]
    %v275 = vld [vmem:[#allocation7 + $0xe4] sm:$0xf]
    %v276 = vld [vmem:[#allocation7 + $0xe8] sm:$0xf]
    %v277 = vld [vmem:[#allocation7 + $0xec] sm:$0xf]
    %v278 = vld [vmem:[#allocation7 + $0xf0] sm:$0xf]
    %v279 = vld [vmem:[#allocation7 + $0xf4] sm:$0xf]
    %v280 = vld [vmem:[#allocation7 + $0xf8] sm:$0xf]
    %v281 = vld [vmem:[#allocation7 + $0xfc] sm:$0xf]
    %v282 = vld [vmem:[%s4] sm:$0x1]
    %v284 = vlaneseq
    %v285 = vshrl.u32 %v284, 7
    %v286 = vsub.s32 0, %v285
    %v287 = vrot.slane %v282, %v286
    %v353 = vunpack.c.l.b16 %v218
    %v354 = vunpack.c.l.b16 %v219
    %v355 = vunpack.c.l.b16 %v220
    %v356 = vunpack.c.l.b16 %v221
    %v357 = vunpack.c.l.b16 %v222
    %v358 = vunpack.c.l.b16 %v223
    %v359 = vunpack.c.l.b16 %v224
    %v360 = vunpack.c.l.b16 %v225
    %v361 = vunpack.c.l.b16 %v226
    %v362 = vunpack.c.l.b16 %v227
    %v363 = vunpack.c.l.b16 %v228
    %v364 = vunpack.c.l.b16 %v229
    %v365 = vunpack.c.l.b16 %v230
    %v366 = vunpack.c.l.b16 %v231
    %v367 = vunpack.c.l.b16 %v232
    %v368 = vunpack.c.l.b16 %v233
    %v369 = vunpack.c.l.b16 %v234
    %v370 = vunpack.c.l.b16 %v235
    %v371 = vunpack.c.l.b16 %v236
    %v372 = vunpack.c.l.b16 %v237
    %v373 = vunpack.c.l.b16 %v238
    %v374 = vunpack.c.l.b16 %v239
    %v375 = vunpack.c.l.b16 %v240
    %v376 = vunpack.c.l.b16 %v241
    %v377 = vunpack.c.l.b16 %v242
    %v378 = vunpack.c.l.b16 %v243
    %v379 = vunpack.c.l.b16 %v244
    %v380 = vunpack.c.l.b16 %v245
    %v381 = vunpack.c.l.b16 %v246
    %v382 = vunpack.c.l.b16 %v247
    %v383 = vunpack.c.l.b16 %v248
    %v384 = vunpack.c.l.b16 %v249
    %v385 = vunpack.c.l.b16 %v250
    %v386 = vunpack.c.l.b16 %v251
    %v387 = vunpack.c.l.b16 %v252
    %v388 = vunpack.c.l.b16 %v253
    %v389 = vunpack.c.l.b16 %v254
    %v390 = vunpack.c.l.b16 %v255
    %v391 = vunpack.c.l.b16 %v256
    %v392 = vunpack.c.l.b16 %v257
    %v393 = vunpack.c.l.b16 %v258
    %v394 = vunpack.c.l.b16 %v259
    %v395 = vunpack.c.l.b16 %v260
    %v396 = vunpack.c.l.b16 %v261
    %v397 = vunpack.c.l.b16 %v262
    %v398 = vunpack.c.l.b16 %v263
    %v399 = vunpack.c.l.b16 %v264
    %v400 = vunpack.c.l.b16 %v265
    %v401 = vunpack.c.l.b16 %v266
    %v402 = vunpack.c.l.b16 %v267
    %v403 = vunpack.c.l.b16 %v268
    %v404 = vunpack.c.l.b16 %v269
    %v405 = vunpack.c.l.b16 %v270
    %v406 = vunpack.c.l.b16 %v271
    %v407 = vunpack.c.l.b16 %v272
    %v408 = vunpack.c.l.b16 %v273
    %v409 = vunpack.c.l.b16 %v274
    %v410 = vunpack.c.l.b16 %v275
    %v411 = vunpack.c.l.b16 %v276
    %v412 = vunpack.c.l.b16 %v277
    %v413 = vunpack.c.l.b16 %v278
    %v414 = vunpack.c.l.b16 %v279
    %v415 = vunpack.c.l.b16 %v280
    %v416 = vunpack.c.l.b16 %v281
    %v417 = vpack.c.b16 %v354, %v353
    %v418 = vpack.c.b16 %v356, %v355
    %v419 = vpack.c.b16 %v358, %v357
    %v420 = vpack.c.b16 %v360, %v359
    %v421 = vpack.c.b16 %v362, %v361
    %v422 = vpack.c.b16 %v364, %v363
    %v423 = vpack.c.b16 %v366, %v365
    %v424 = vpack.c.b16 %v368, %v367
    %v425 = vpack.c.b16 %v370, %v369
    %v426 = vpack.c.b16 %v372, %v371
    %v427 = vpack.c.b16 %v374, %v373
    %v428 = vpack.c.b16 %v376, %v375
    %v429 = vpack.c.b16 %v378, %v377
    %v430 = vpack.c.b16 %v380, %v379
    %v431 = vpack.c.b16 %v382, %v381
    %v432 = vpack.c.b16 %v384, %v383
    %v433 = vpack.c.b16 %v386, %v385
    %v434 = vpack.c.b16 %v388, %v387
    %v435 = vpack.c.b16 %v390, %v389
    %v436 = vpack.c.b16 %v392, %v391
    %v437 = vpack.c.b16 %v394, %v393
    %v438 = vpack.c.b16 %v396, %v395
    %v439 = vpack.c.b16 %v398, %v397
    %v440 = vpack.c.b16 %v400, %v399
    %v441 = vpack.c.b16 %v402, %v401
    %v442 = vpack.c.b16 %v404, %v403
    %v443 = vpack.c.b16 %v406, %v405
    %v444 = vpack.c.b16 %v408, %v407
    %v445 = vpack.c.b16 %v410, %v409
    %v446 = vpack.c.b16 %v412, %v411
    %v447 = vpack.c.b16 %v414, %v413
    %v448 = vpack.c.b16 %v416, %v415
    %481 = vmatprep.subr.bf16.mxu0 0
    %482 = vmatpush1.bf16.msra.mxu0 %v417
    %483 = vmatprep.subr.bf16.mxu0 0
    %484 = vmatpush1.bf16.msra.mxu0 %v418
    %485 = vmatprep.subr.bf16.mxu0 0
    %486 = vmatpush1.bf16.msra.mxu0 %v419
    %487 = vmatprep.subr.bf16.mxu0 0
    %488 = vmatpush1.bf16.msra.mxu0 %v420
    %489 = vmatprep.subr.bf16.mxu0 0
    %490 = vmatpush1.bf16.msra.mxu0 %v421
    %491 = vmatprep.subr.bf16.mxu0 0
    %492 = vmatpush1.bf16.msra.mxu0 %v422
    %493 = vmatprep.subr.bf16.mxu0 0
    %494 = vmatpush1.bf16.msra.mxu0 %v423
    %495 = vmatprep.subr.bf16.mxu0 0
    %496 = vmatpush1.bf16.msra.mxu0 %v424
    %497 = vmatprep.subr.bf16.mxu0 0
    %498 = vmatpush1.bf16.msra.mxu0 %v425
    %499 = vmatprep.subr.bf16.mxu0 0
    %500 = vmatpush1.bf16.msra.mxu0 %v426
    %501 = vmatprep.subr.bf16.mxu0 0
    %502 = vmatpush1.bf16.msra.mxu0 %v427
    %503 = vmatprep.subr.bf16.mxu0 0
    %504 = vmatpush1.bf16.msra.mxu0 %v428
    %505 = vmatprep.subr.bf16.mxu0 0
    %506 = vmatpush1.bf16.msra.mxu0 %v429
    %507 = vmatprep.subr.bf16.mxu0 0
    %508 = vmatpush1.bf16.msra.mxu0 %v430
    %509 = vmatprep.subr.bf16.mxu0 0
    %510 = vmatpush1.bf16.msra.mxu0 %v431
    %511 = vmatprep.subr.bf16.mxu0 0
    %512 = vmatpush1.bf16.msra.mxu0 %v432
    %513 = vmatprep.mubr.bf16.mxu0 %v215
    %514 = vmatmul.mubr.bf16.gmra.mrb[0].mxu0 %v214
    %v515 = vpop.f32.mrb[0].mxu0
    %v516 = vadd.f32 %v287, %v515
    %v517 = vpop.f32.mrb[0].mxu0
    %v518 = vpop.f32.mrb[0].mxu0
    %v519 = vpop.f32.mrb[0].mxu0
    %520 = vdwg.mxu0
    %521 = vmatprep.subr.bf16.mxu0 0
    %522 = vmatpush1.bf16.msra.mxu0 %v433
    %523 = vmatprep.subr.bf16.mxu0 0
    %524 = vmatpush1.bf16.msra.mxu0 %v434
    %525 = vmatprep.subr.bf16.mxu0 0
    %526 = vmatpush1.bf16.msra.mxu0 %v435
    %527 = vmatprep.subr.bf16.mxu0 0
    %528 = vmatpush1.bf16.msra.mxu0 %v436
    %529 = vmatprep.subr.bf16.mxu0 0
    %530 = vmatpush1.bf16.msra.mxu0 %v437
    %531 = vmatprep.subr.bf16.mxu0 0
    %532 = vmatpush1.bf16.msra.mxu0 %v438
    %533 = vmatprep.subr.bf16.mxu0 0
    %534 = vmatpush1.bf16.msra.mxu0 %v439
    %535 = vmatprep.subr.bf16.mxu0 0
    %536 = vmatpush1.bf16.msra.mxu0 %v440
    %537 = vmatprep.subr.bf16.mxu0 0
    %538 = vmatpush1.bf16.msra.mxu0 %v441
    %539 = vmatprep.subr.bf16.mxu0 0
    %540 = vmatpush1.bf16.msra.mxu0 %v442
    %541 = vmatprep.subr.bf16.mxu0 0
    %542 = vmatpush1.bf16.msra.mxu0 %v443
    %543 = vmatprep.subr.bf16.mxu0 0
    %544 = vmatpush1.bf16.msra.mxu0 %v444
    %545 = vmatprep.subr.bf16.mxu0 0
    %546 = vmatpush1.bf16.msra.mxu0 %v445
    %547 = vmatprep.subr.bf16.mxu0 0
    %548 = vmatpush1.bf16.msra.mxu0 %v446
    %549 = vmatprep.subr.bf16.mxu0 0
    %550 = vmatpush1.bf16.msra.mxu0 %v447
    %551 = vmatprep.subr.bf16.mxu0 0
    %552 = vmatpush1.bf16.msra.mxu0 %v448
    %553 = vmatprep.mubr.bf16.mxu0 %v217
    %554 = vmatmul.mubr.bf16.gmra.mrb[0].mxu0 %v216
    %v555 = vpop.f32.mrb[0].mxu0
    %v556 = vadd.f32 %v516, %v555
    %v557 = vpop.f32.mrb[0].mxu0
    %v558 = vpop.f32.mrb[0].mxu0
    %v559 = vpop.f32.mrb[0].mxu0
    %560 = vdwg.mxu0
    %v561 = vmax.f32 %v556, 0.0
    %v562 = vld [vmem:[%s5] sm:$0x1]
    %v564 = vlaneseq
    %v565 = vshrl.u32 %v564, 7
    %v566 = vsub.s32 0, %v565
    %v567 = vrot.slane %v562, %v566
    %v569 = vmul.f32 %v561, %v567
    %570 = vadd.xlane.f32.xlu0 %v569
    %v571 = vpop.xlane.xlu0 %570
    %s572 = sld [smem:[#allocation2]]
    %v573 = vstv %s572
    %v574 = vadd.f32 %v571, %v573
    %v575 = vmax.f32 %v574, 0.0
    %vm576 = vcmask 7168
    %577 = vst.msk [vmem:[%s7] sm:$0xff] %vm576, %v575
    // Predicated region
    $region42: #{tpu_custom_call.1} parent=1 // pred_check
      _
    $region43: #{tpu_custom_call.1} parent=1 // pred_check_branch
      %579 = sbr.rel (0) target = $region45
    $region44: #{tpu_custom_call.1} parent=1 // pred_region
      _
    $region45: #{tpu_custom_call.1} parent=1 // pred_fallthru
      _
    // Predicated region
    $region46: #{tpu_custom_call.1} parent=1 // pred_check
      _
    $region47: #{tpu_custom_call.1} parent=1 // pred_check_branch
      %581 = sbr.rel (0) target = $region49
    $region48: #{tpu_custom_call.1} parent=1 // pred_region
      _
    $region49: #{tpu_custom_call.1} parent=1 // pred_fallthru
      _
    %582 = vsyncpa [#allocation4], 1
    %583 = vsyncpa [#allocation6], 1

</llo_original>
